<compile_context>
chip_gen: v6e
topology: v6e:2x2x1
jax: 0.10.0
libtpu: 0.0.40
codegen_flags: <defaults>
</compile_context>

<pallas_src>
import functools
import math

import jax
import jax.numpy as jnp
from jax import lax
from jax.experimental import pallas as pl
from jax.experimental.pallas import tpu as pltpu


def _round_up(x: int, m: int) -> int:
    return (x + m - 1) // m * m


def _bsoft_ndcg_kernel(preds_ref, labels_ref, loss_ref, *, k: int, inv_disc):
    preds = preds_ref[...]     # (block_b, N) float32
    labels = labels_ref[...]   # (block_b, N) float32
    bt, n = preds.shape

    col = lax.broadcasted_iota(jnp.int32, (bt, n), 1)
    neg = jnp.float32(-jnp.inf)

    taken_l = jnp.zeros((bt, n), dtype=jnp.bool_)
    taken_p = jnp.zeros((bt, n), dtype=jnp.bool_)
    gmask = jnp.zeros((bt, n), dtype=jnp.float32)   # deferred dcg gather weights
    idcg = jnp.zeros((bt, 1), dtype=jnp.float32)

    # k is small (default 2): fully unrolled passes of masked row-wise max.
    # Per pass: 2 max-reduces + 2 min-index-reduces (XLU); the dcg gather-sum
    # is deferred to a single reduction after the loop.
    for r in range(k):
        w = jnp.float32(inv_disc[r])  # host-precomputed 1/log2(r+2)

        # --- dcg side: position of the r-th largest label (stable tie-break:
        #     smallest index wins). Taken positions are -inf so they never win
        #     again for finite inputs.
        ml = jnp.where(taken_l, neg, labels)
        lmax = jnp.max(ml, axis=1, keepdims=True)
        sel = jnp.min(jnp.where(ml == lmax, col, n), axis=1, keepdims=True)
        onehot = col == sel
        gmask = gmask + jnp.where(onehot, w, 0.0)
        taken_l = taken_l | onehot

        # --- idcg side: r-th largest pred value.
        mp = jnp.where(taken_p, neg, preds)
        pmax = jnp.max(mp, axis=1, keepdims=True)
        idcg = idcg + w * pmax
        psel = jnp.min(jnp.where(mp == pmax, col, n), axis=1, keepdims=True)
        taken_p = taken_p | (col == psel)

    dcg = jnp.sum(gmask * preds, axis=1, keepdims=True)            # (block_b, 1)
    per_row = jnp.where(idcg == 0.0, 0.0, jnp.abs(dcg - idcg))     # (block_b, 1)

    # Per-tile partial sum written as one lane-dense (8,128) block (unmasked vst).
    # Batch-padded rows are all-zero -> idcg == 0 -> contribute 0 to the sum.
    tile_sum = jnp.sum(per_row, axis=0, keepdims=True)             # (1, 1)
    loss_ref[...] = jnp.broadcast_to(tile_sum, loss_ref.shape)     # (8, 128)


def _choose_block_b(B: int, N: int) -> int:
    """Pick a batch-tile size: VMEM-budgeted, >=2 tiles when B permits, and
    dividing B exactly when possible (so no batch padding is materialized)."""
    # Per grid step: 2 inputs x 2 pipeline buffers x f32 (streamed) plus ~6
    # (block_b, N) f32 intermediates (masks, iota, onehots)  => ~40*N bytes/row.
    budget_rows = (12 << 20) // max(40 * N, 1)
    budget_rows = max(8, min(512, (budget_rows // 8) * 8))

    target = min(budget_rows, _round_up(B, 8))
    if B > 8:
        # Guarantee >= 2 grid tiles so the "parallel" batch axis shards across
        # both TensorCores on v7x and DMA overlaps compute.
        target = min(target, _round_up((B + 1) // 2, 8))
    target = max(8, target)

    block_b = target
    if B % 8 == 0:
        for bb in range(target, 7, -8):      # largest multiple of 8 dividing B
            if B % bb == 0:
                block_b = bb
                break
    return block_b


def bsoft_ndcg_loss(preds, labels, k: int = 2, block_b: int | None = None):
    """Pallas TPU implementation of BSoftNDCGLoss.forward."""
    preds = jnp.asarray(preds, jnp.float32)
    labels = jnp.asarray(labels, jnp.float32)
    B, N = preds.shape
    k = int(min(k, N))

    if block_b is None:
        block_b = _choose_block_b(B, N)
    block_b = max(8, (block_b // 8) * 8)

    b_pad = _round_up(B, block_b)
    num_tiles = b_pad // block_b

    # Only the batch axis is ever padded (with zero rows -> per-row loss 0); the
    # list axis uses a full-N block so no column padding / extra HBM copy exists.
    if b_pad != B:
        preds_p = jnp.pad(preds, ((0, b_pad - B), (0, 0)))
        labels_p = jnp.pad(labels, ((0, b_pad - B), (0, 0)))
    else:
        preds_p, labels_p = preds, labels

    inv_disc = tuple(1.0 / math.log2(r + 2.0) for r in range(k))

    out = pl.pallas_call(
        functools.partial(_bsoft_ndcg_kernel, k=k, inv_disc=inv_disc),
        out_shape=jax.ShapeDtypeStruct((num_tiles * 8, 128), jnp.float32),
        grid=(num_tiles,),
        in_specs=[
            pl.BlockSpec((block_b, N), lambda i: (i, 0)),
            pl.BlockSpec((block_b, N), lambda i: (i, 0)),
        ],
        out_specs=pl.BlockSpec((8, 128), lambda i: (i, 0)),
        compiler_params=pltpu.CompilerParams(
            dimension_semantics=("parallel",),
        ),
    )(preds_p, labels_p)

    # One partial sum per tile (replicated across the (8,128) block).
    tile_sums = out.reshape(num_tiles, 8, 128)[:, 0, 0]
    return jnp.sum(tile_sums) / jnp.float32(B)


def _reference_loss(preds, labels, k: int = 2):
    """Pure-JAX reference mirroring the PyTorch module (stable tie-break)."""
    N = preds.shape[1]
    kk = min(k, N)
    disc = jnp.log2(jnp.arange(N, dtype=jnp.float32) + 2.0)

    def per_row(p, l):
        ideal_index = jnp.argsort(-l)          # stable descending sort of labels
        sorted_preds = p[ideal_index]
        dcg = jnp.sum(sorted_preds[:kk] / disc[:kk])
        ipreds = -jnp.sort(-p)                 # preds sorted descending
        idcg = jnp.sum(ipreds[:kk] / disc[:kk])
        return jnp.where(idcg == 0.0, 0.0, jnp.abs(dcg - idcg))

    return jnp.mean(jax.vmap(per_row)(preds, labels))


if __name__ == "__main__":
    # Case 1: small aligned-ish case from the module defaults (k=2).
    B, N, K = 2, 8, 2
    key = jax.random.PRNGKey(0)
    kp, kl = jax.random.split(key)
    preds = jax.random.normal(kp, (B, N), dtype=jnp.float32)
    labels = jax.random.randint(kl, (B, N), 0, 4).astype(jnp.float32)  # tied grades
    loss = bsoft_ndcg_loss(preds, labels, k=K)
    jax.block_until_ready(loss)
    ref = _reference_loss(preds, labels, k=K)
    assert jnp.allclose(loss, ref, atol=1e-5, rtol=1e-5), (loss, ref)

    # Case 2: non-aligned N and batch padding path, heavy label ties.
    kp2, kl2 = jax.random.split(jax.random.PRNGKey(1))
    B2, N2, K2 = 5, 37, 3
    preds2 = jax.random.normal(kp2, (B2, N2), dtype=jnp.float32)
    labels2 = jax.random.randint(kl2, (B2, N2), 0, 3).astype(jnp.float32)
    loss2 = bsoft_ndcg_loss(preds2, labels2, k=K2)
    jax.block_until_ready(loss2)
    ref2 = _reference_loss(preds2, labels2, k=K2)
    assert jnp.allclose(loss2, ref2, atol=1e-5, rtol=1e-5), (loss2, ref2)

    # Case 3: multi-tile grid (>=2 tiles, no padding at all), larger k.
    kp3, kl3 = jax.random.split(jax.random.PRNGKey(2))
    B3, N3, K3 = 64, 200, 4
    preds3 = jax.random.normal(kp3, (B3, N3), dtype=jnp.float32)
    labels3 = jax.random.randint(kl3, (B3, N3), 0, 5).astype(jnp.float32)
    loss3 = bsoft_ndcg_loss(preds3, labels3, k=K3)
    jax.block_until_ready(loss3)
    ref3 = _reference_loss(preds3, labels3, k=K3)
    assert jnp.allclose(loss3, ref3, atol=1e-5, rtol=1e-5), (loss3, ref3)

    print("KERNEL_OK")
</pallas_src>

<mosaic_0001>
module attributes {stable_mosaic.version = 11 : i64} {
  func.func @_bsoft_ndcg_kernel(%arg0: i32, %arg1: memref<8x8xf32, #tpu.memory_space<vmem>>, %arg2: memref<8x8xf32, #tpu.memory_space<vmem>>, %arg3: memref<8x128xf32, #tpu.memory_space<vmem>>) attributes {dimension_semantics = [#tpu.dimension_semantics<parallel>], iteration_bounds = array<i64: 1>, scalar_prefetch = 0 : i64, scratch_operands = 0 : i64, tpu.core_type = #tpu.core_type<tc>, window_params = [{transform_indices = @transform_0, window_bounds = array<i64: 8, 8>}, {transform_indices = @transform_1, window_bounds = array<i64: 8, 8>}, {transform_indices = @transform_2, window_bounds = array<i64: 8, 128>}]} {
    %c0 = arith.constant 0 : index
    %c0_0 = arith.constant 0 : index
    %0 = vector.load %arg1[%c0, %c0_0] : memref<8x8xf32, #tpu.memory_space<vmem>>, vector<8x8xf32>
    %c0_1 = arith.constant 0 : index
    %c0_2 = arith.constant 0 : index
    %1 = vector.load %arg2[%c0_1, %c0_2] : memref<8x8xf32, #tpu.memory_space<vmem>>, vector<8x8xf32>
    %2 = tpu.iota {dimensions = array<i32: 1>} : vector<8x8xi32>
    %false = arith.constant false
    %3 = vector.broadcast %false : i1 to vector<8x8xi1>
    %false_3 = arith.constant false
    %4 = vector.broadcast %false_3 : i1 to vector<8x8xi1>
    %cst = arith.constant 0.000000e+00 : f32
    %5 = vector.broadcast %cst : f32 to vector<8x8xf32>
    %cst_4 = arith.constant 0.000000e+00 : f32
    %6 = vector.broadcast %cst_4 : f32 to vector<8x1xf32>
    %cst_5 = arith.constant 0xFF800000 : f32
    %7 = vector.broadcast %cst_5 : f32 to vector<8x8xf32>
    %8 = arith.select %3, %7, %1 : vector<8x8xi1>, vector<8x8xf32>
    %cst_6 = arith.constant dense<0xFF800000> : vector<8xf32>
    %9 = vector.multi_reduction <maximumf>, %8, %cst_6 [1] : vector<8x8xf32> to vector<8xf32>
    %10 = vector.shape_cast %9 : vector<8xf32> to vector<8x1xf32>
    %11 = vector.broadcast %10 : vector<8x1xf32> to vector<8x8xf32>
    %12 = arith.cmpf oeq, %8, %11 : vector<8x8xf32>
    %c8_i32 = arith.constant 8 : i32
    %13 = vector.broadcast %c8_i32 : i32 to vector<8x8xi32>
    %14 = arith.select %12, %2, %13 : vector<8x8xi1>, vector<8x8xi32>
    %cst_7 = arith.constant dense<2147483647> : vector<8xi32>
    %15 = vector.multi_reduction <minsi>, %14, %cst_7 [1] : vector<8x8xi32> to vector<8xi32>
    %16 = vector.shape_cast %15 : vector<8xi32> to vector<8x1xi32>
    %17 = vector.broadcast %16 : vector<8x1xi32> to vector<8x8xi32>
    %18 = arith.cmpi eq, %2, %17 : vector<8x8xi32>
    %cst_8 = arith.constant 1.000000e+00 : f32
    %cst_9 = arith.constant 0.000000e+00 : f32
    %19 = vector.broadcast %cst_8 : f32 to vector<8x8xf32>
    %20 = vector.broadcast %cst_9 : f32 to vector<8x8xf32>
    %21 = arith.select %18, %19, %20 : vector<8x8xi1>, vector<8x8xf32>
    %22 = arith.addf %5, %21 : vector<8x8xf32>
    %23 = arith.ori %3, %18 : vector<8x8xi1>
    %cst_10 = arith.constant 0xFF800000 : f32
    %24 = vector.broadcast %cst_10 : f32 to vector<8x8xf32>
    %25 = arith.select %4, %24, %0 : vector<8x8xi1>, vector<8x8xf32>
    %cst_11 = arith.constant dense<0xFF800000> : vector<8xf32>
    %26 = vector.multi_reduction <maximumf>, %25, %cst_11 [1] : vector<8x8xf32> to vector<8xf32>
    %27 = vector.shape_cast %26 : vector<8xf32> to vector<8x1xf32>
    %cst_12 = arith.constant 1.000000e+00 : f32
    %28 = vector.broadcast %cst_12 : f32 to vector<8x1xf32>
    %29 = arith.mulf %28, %27 : vector<8x1xf32>
    %30 = arith.addf %6, %29 : vector<8x1xf32>
    %31 = vector.broadcast %27 : vector<8x1xf32> to vector<8x8xf32>
    %32 = arith.cmpf oeq, %25, %31 : vector<8x8xf32>
    %c8_i32_13 = arith.constant 8 : i32
    %33 = vector.broadcast %c8_i32_13 : i32 to vector<8x8xi32>
    %34 = arith.select %32, %2, %33 : vector<8x8xi1>, vector<8x8xi32>
    %cst_14 = arith.constant dense<2147483647> : vector<8xi32>
    %35 = vector.multi_reduction <minsi>, %34, %cst_14 [1] : vector<8x8xi32> to vector<8xi32>
    %36 = vector.shape_cast %35 : vector<8xi32> to vector<8x1xi32>
    %37 = vector.broadcast %36 : vector<8x1xi32> to vector<8x8xi32>
    %38 = arith.cmpi eq, %2, %37 : vector<8x8xi32>
    %39 = arith.ori %4, %38 : vector<8x8xi1>
    %cst_15 = arith.constant 0xFF800000 : f32
    %40 = vector.broadcast %cst_15 : f32 to vector<8x8xf32>
    %41 = arith.select %23, %40, %1 : vector<8x8xi1>, vector<8x8xf32>
    %cst_16 = arith.constant dense<0xFF800000> : vector<8xf32>
    %42 = vector.multi_reduction <maximumf>, %41, %cst_16 [1] : vector<8x8xf32> to vector<8xf32>
    %43 = vector.shape_cast %42 : vector<8xf32> to vector<8x1xf32>
    %44 = vector.broadcast %43 : vector<8x1xf32> to vector<8x8xf32>
    %45 = arith.cmpf oeq, %41, %44 : vector<8x8xf32>
    %c8_i32_17 = arith.constant 8 : i32
    %46 = vector.broadcast %c8_i32_17 : i32 to vector<8x8xi32>
    %47 = arith.select %45, %2, %46 : vector<8x8xi1>, vector<8x8xi32>
    %cst_18 = arith.constant dense<2147483647> : vector<8xi32>
    %48 = vector.multi_reduction <minsi>, %47, %cst_18 [1] : vector<8x8xi32> to vector<8xi32>
    %49 = vector.shape_cast %48 : vector<8xi32> to vector<8x1xi32>
    %50 = vector.broadcast %49 : vector<8x1xi32> to vector<8x8xi32>
    %51 = arith.cmpi eq, %2, %50 : vector<8x8xi32>
    %cst_19 = arith.constant 0.630929768 : f32
    %cst_20 = arith.constant 0.000000e+00 : f32
    %52 = vector.broadcast %cst_19 : f32 to vector<8x8xf32>
    %53 = vector.broadcast %cst_20 : f32 to vector<8x8xf32>
    %54 = arith.select %51, %52, %53 : vector<8x8xi1>, vector<8x8xf32>
    %55 = arith.addf %22, %54 : vector<8x8xf32>
    %cst_21 = arith.constant 0xFF800000 : f32
    %56 = vector.broadcast %cst_21 : f32 to vector<8x8xf32>
    %57 = arith.select %39, %56, %0 : vector<8x8xi1>, vector<8x8xf32>
    %cst_22 = arith.constant dense<0xFF800000> : vector<8xf32>
    %58 = vector.multi_reduction <maximumf>, %57, %cst_22 [1] : vector<8x8xf32> to vector<8xf32>
    %59 = vector.shape_cast %58 : vector<8xf32> to vector<8x1xf32>
    %cst_23 = arith.constant 0.630929768 : f32
    %60 = vector.broadcast %cst_23 : f32 to vector<8x1xf32>
    %61 = arith.mulf %60, %59 : vector<8x1xf32>
    %62 = arith.addf %30, %61 : vector<8x1xf32>
    %63 = arith.mulf %55, %0 : vector<8x8xf32>
    %cst_24 = arith.constant dense<0.000000e+00> : vector<8xf32>
    %64 = vector.multi_reduction <add>, %63, %cst_24 [1] : vector<8x8xf32> to vector<8xf32>
    %65 = vector.shape_cast %64 : vector<8xf32> to vector<8x1xf32>
    %cst_25 = arith.constant 0.000000e+00 : f32
    %66 = vector.broadcast %cst_25 : f32 to vector<8x1xf32>
    %67 = arith.cmpf oeq, %62, %66 : vector<8x1xf32>
    %68 = arith.subf %65, %62 : vector<8x1xf32>
    %69 = math.absf %68 : vector<8x1xf32>
    %cst_26 = arith.constant 0.000000e+00 : f32
    %70 = vector.broadcast %cst_26 : f32 to vector<8x1xf32>
    %71 = arith.select %67, %70, %69 : vector<8x1xi1>, vector<8x1xf32>
    %cst_27 = arith.constant dense<0.000000e+00> : vector<1xf32>
    %72 = vector.multi_reduction <add>, %71, %cst_27 [0] : vector<8x1xf32> to vector<1xf32>
    %73 = vector.shape_cast %72 : vector<1xf32> to vector<1x1xf32>
    %74 = vector.shape_cast %73 : vector<1x1xf32> to vector<1x1xf32>
    %75 = vector.broadcast %74 : vector<1x1xf32> to vector<8x128xf32>
    %c0_28 = arith.constant 0 : index
    %c0_29 = arith.constant 0 : index
    %76 = vector.load %arg3[%c0_28, %c0_29] : memref<8x128xf32, #tpu.memory_space<vmem>>, vector<8x128xf32>
    tpu.vector_store %arg3[%c0_28, %c0_29], %75 {strides = array<i32>} : memref<8x128xf32, #tpu.memory_space<vmem>>, vector<8x128xf32>,
    return
  }
  func.func @transform_0(%arg0: i32) -> (i32, i32) {
    %c0_i32 = arith.constant 0 : i32
    %c0_i32_0 = arith.constant 0 : i32
    return %arg0, %c0_i32 : i32, i32
  }
  func.func @transform_1(%arg0: i32) -> (i32, i32) {
    %c0_i32 = arith.constant 0 : i32
    %c0_i32_0 = arith.constant 0 : i32
    return %arg0, %c0_i32 : i32, i32
  }
  func.func @transform_2(%arg0: i32) -> (i32, i32) {
    %c0_i32 = arith.constant 0 : i32
    %c0_i32_0 = arith.constant 0 : i32
    return %arg0, %c0_i32 : i32, i32
  }
}

</mosaic_0001>

<llo_original>
// kernel: tpu_custom_call.1
$region0: #{tpu_custom_call.1}
  #allocation0 [shape = 'u32[]', space=smem, size = 0x4, offset = 0x4, fixed_abs, tag = 'smem constant byte address 0x4 - core index']
  #allocation1 [shape = 'u32[144,128]{1,0:T(1,128)}', space=vmem, size = 0x12000, scoped, tag = 'internal scratch']
  %s0 = inlined_call_operand.hbm [shape: f32[8,8], index: 0, kind: input, shape index: {}]
  %s1 = inlined_call_operand.hbm [shape: f32[8,8], index: 1, kind: input, shape index: {}]
  %s2 = inlined_call_operand.hbm [shape: f32[8,128], index: 2, kind: output, shape index: {}]
  %s3 = sld [smem:[#allocation0]]
  $region26: #{tpu_custom_call.1} parent=0
    _
  %s5 = ssub.s32 1, %s3
  %s6 = scalar_select 0, %s5, %s3
  $region1: #{tpu_custom_call.1} parent=0
    #allocation2 [shape = 'u8[4096]{0}', space=vmem, size = 0x1000, scoped, tag = 'input window, operand 0, single buffered']
    #allocation3 [shape = 's32[1]{0}', space=sflag, size = 0x4, scoped, tag = 'scoped memory for tpu_custom_call.1']
    #allocation4 [shape = 's32[1]{0}', space=sflag, size = 0x4, scoped, tag = 'scoped memory for tpu_custom_call.1']
    #allocation5 [shape = 'u8[4096]{0}', space=vmem, size = 0x1000, scoped, tag = 'input window, operand 1, single buffered']
    #allocation6 [shape = 's32[1]{0}', space=sflag, size = 0x4, scoped, tag = 'scoped memory for tpu_custom_call.1']
    #allocation7 [shape = 'u8[4096]{0}', space=vmem, size = 0x1000, scoped, tag = 'output window, operand 0, single buffered']
    %7 = vsyncpa [#allocation3], 0
    %8 = vsyncpa [#allocation6], 0
    %9 = vsyncpa [#allocation4], 0
    // Predicated region
    $region2: #{tpu_custom_call.1} parent=1 // pred_check
      _
    $region3: #{tpu_custom_call.1} parent=1 // pred_check_branch
      %11 = sbr.rel (0) target = $region5
    $region4: #{tpu_custom_call.1} parent=1 // pred_region
      %s13 = ssub.s32 128, 128
      %14 = vsyncadd [#allocation3], %s13
      %s16 = sshll.u32 [#allocation2], 4
      %s17 = int_to_ptr.vmem [resolvable:$true] %s16
      %19 = dma.hbm_to_vmem [thread:$0]  %s0, 128, %s17, [#allocation3]
    $region5: #{tpu_custom_call.1} parent=1 // pred_fallthru
      _
    // Predicated region
    $region6: #{tpu_custom_call.1} parent=1 // pred_check
      _
    $region7: #{tpu_custom_call.1} parent=1 // pred_check_branch
      %21 = sbr.rel (0) target = $region9
    $region8: #{tpu_custom_call.1} parent=1 // pred_region
      %s23 = ssub.s32 128, 128
      %24 = vsyncadd [#allocation6], %s23
      %s26 = sshll.u32 [#allocation5], 4
      %s27 = int_to_ptr.vmem [resolvable:$true] %s26
      %29 = dma.hbm_to_vmem [thread:$0]  %s1, 128, %s27, [#allocation6]
    $region9: #{tpu_custom_call.1} parent=1 // pred_fallthru
      _
    // Predicated region
    $region10: #{tpu_custom_call.1} parent=1 // pred_check
      _
    $region11: #{tpu_custom_call.1} parent=1 // pred_check_branch
      %31 = sbr.rel (0) target = $region13
    $region12: #{tpu_custom_call.1} parent=1 // pred_region
      %32 = dma.done [#allocation3], 128
    $region13: #{tpu_custom_call.1} parent=1 // pred_fallthru
      _
    // Predicated region
    $region14: #{tpu_custom_call.1} parent=1 // pred_check
      _
    $region15: #{tpu_custom_call.1} parent=1 // pred_check_branch
      %34 = sbr.rel (0) target = $region17
    $region16: #{tpu_custom_call.1} parent=1 // pred_region
      %35 = dma.done [#allocation6], 128
    $region17: #{tpu_custom_call.1} parent=1 // pred_fallthru
      _
    %v36 = vld [vmem:[#allocation2] sm:$0xff]
    %v37 = vld [vmem:[#allocation5] sm:$0xff]
    %v38 = vlaneseq
    %v39 = vand.u32 %v38, 127
    %vm40 = vcmask 64512
    %v41 = vsel %vm40, %v37, -inf
    %42 = vmax.xlane.f32.xlu0 %v41
    %v43 = vpop.xlane.xlu0 %42
    %vm44 = vcmp.eq.f32.partialorder %v37, %v43
    %v45 = vsel %vm44, %v39, 8
    %v46 = vsel %vm40, %v45, 2147483647
    %v47 = vand.u32 %v46, 65535
    %v48 = vshra.s32 %v46, 16
    %v49 = vcvt.s32.f32 %v47
    %v50 = vcvt.s32.f32 %v48
    %51 = vmin.xlane.f32.xlu0 %v50
    %v52 = vpop.xlane.xlu0 %51
    %vm53 = vcmp.eq.f32.partialorder %v50, %v52
    %v54 = vsel %vm53, %v49, inf
    %55 = vmin.xlane.f32.xlu0 %v54
    %v56 = vpop.xlane.xlu0 %55
    %v57 = vcvt.f32.s32 %v56
    %v58 = vcvt.f32.s32 %v52
    %v59 = vshll.u32 %v58, 16
    %v60 = vadd.s32 %v59, %v57
    %vm61 = vcmp.eq.s32.totalorder %v39, %v60
    %v62 = vsel %vm61, 1.0, 0.0
    %v63 = vadd.f32 %v62, 0.0
    %v64 = vsel %vm40, %v36, -inf
    %65 = vmax.xlane.f32.xlu0 %v64
    %v66 = vpop.xlane.xlu0 %65
    %v67 = vadd.f32 %v66, 0.0
    %vm68 = vcmp.eq.f32.partialorder %v36, %v66
    %v69 = vsel %vm68, %v39, 8
    %v70 = vsel %vm40, %v69, 2147483647
    %v71 = vand.u32 %v70, 65535
    %v72 = vshra.s32 %v70, 16
    %v73 = vcvt.s32.f32 %v71
    %v74 = vcvt.s32.f32 %v72
    %75 = vmin.xlane.f32.xlu0 %v74
    %v76 = vpop.xlane.xlu0 %75
    %vm77 = vcmp.eq.f32.partialorder %v74, %v76
    %v78 = vsel %vm77, %v73, inf
    %79 = vmin.xlane.f32.xlu0 %v78
    %v80 = vpop.xlane.xlu0 %79
    %v81 = vcvt.f32.s32 %v80
    %v82 = vcvt.f32.s32 %v76
    %v83 = vshll.u32 %v82, 16
    %v84 = vadd.s32 %v83, %v81
    %vm85 = vcmp.eq.s32.totalorder %v39, %v84
    %v86 = vsel %vm61, -inf, %v37
    %v87 = vsel %vm40, %v86, -inf
    %88 = vmax.xlane.f32.xlu0 %v87
    %v89 = vpop.xlane.xlu0 %88
    %vm90 = vcmp.eq.f32.partialorder %v86, %v89
    %v91 = vsel %vm90, %v39, 8
    %v92 = vsel %vm40, %v91, 2147483647
    %v93 = vand.u32 %v92, 65535
    %v94 = vshra.s32 %v92, 16
    %v95 = vcvt.s32.f32 %v93
    %v96 = vcvt.s32.f32 %v94
    %97 = vmin.xlane.f32.xlu0 %v96
    %v98 = vpop.xlane.xlu0 %97
    %vm99 = vcmp.eq.f32.partialorder %v96, %v98
    %v100 = vsel %vm99, %v95, inf
    %101 = vmin.xlane.f32.xlu0 %v100
    %v102 = vpop.xlane.xlu0 %101
    %v103 = vcvt.f32.s32 %v102
    %v104 = vcvt.f32.s32 %v98
    %v105 = vshll.u32 %v104, 16
    %v106 = vadd.s32 %v105, %v103
    %vm107 = vcmp.eq.s32.totalorder %v39, %v106
    %v108 = vsel %vm107, 0.63092977, 0.0
    %v109 = vadd.f32 %v63, %v108
    %v110 = vsel %vm85, -inf, %v36
    %v111 = vsel %vm40, %v110, -inf
    %112 = vmax.xlane.f32.xlu0 %v111
    %v113 = vpop.xlane.xlu0 %112
    %v114 = vmul.f32 %v113, 0.63092977
    %v115 = vadd.f32 %v67, %v114
    %v116 = vmul.f32 %v109, %v36
    %v117 = vsel %vm40, %v116, 0.0
    %118 = vadd.xlane.f32.xlu0 %v117
    %v119 = vpop.xlane.xlu0 %118
    %vm120 = vcmp.eq.f32.partialorder %v115, 0.0
    %v121 = vsub.f32 %v119, %v115
    %v122 = vand.u32 2147483647, %v121
    %v123 = vsel %vm120, 0.0, %v122
    %v124 = vrot.slane %v123, 4
    %v125 = vadd.f32 %v123, %v124
    %v126 = vrot.slane %v125, 2
    %v127 = vadd.f32 %v125, %v126
    %v128 = vrot.slane %v127, 1
    %v129 = vadd.f32 %v127, %v128
    %130 = vst [vmem:[#allocation7] sm:$0xff] %v129
    // Predicated region
    $region18: #{tpu_custom_call.1} parent=1 // pred_check
      _
    $region19: #{tpu_custom_call.1} parent=1 // pred_check_branch
      %132 = sbr.rel (0) target = $region21
    $region20: #{tpu_custom_call.1} parent=1 // pred_region
      %s134 = ssub.s32 128, 128
      %135 = vsyncadd [#allocation4], %s134
      %s137 = sshll.u32 [#allocation7], 4
      %s138 = int_to_ptr.vmem [resolvable:$true] %s137
      %140 = dma.vmem_to_hbm [thread:$0]  %s138, 128, %s2, [#allocation4]
    $region21: #{tpu_custom_call.1} parent=1 // pred_fallthru
      _
    // Predicated region
    $region22: #{tpu_custom_call.1} parent=1 // pred_check
      _
    $region23: #{tpu_custom_call.1} parent=1 // pred_check_branch
      %142 = sbr.rel (0) target = $region25
    $region24: #{tpu_custom_call.1} parent=1 // pred_region
      %143 = dma.done [#allocation4], 128
    $region25: #{tpu_custom_call.1} parent=1 // pred_fallthru
      _
    %144 = vsyncpa [#allocation3], 1
    %145 = vsyncpa [#allocation6], 1
    %146 = vsyncpa [#allocation4], 1

</llo_original>
